<compile_context>
chip_gen: v5e
topology: v5e:2x2
jax: 0.10.0
libtpu: 0.0.40
codegen_flags: <defaults>
</compile_context>

<pallas_src>
import functools

import jax
import jax.numpy as jnp
from jax import lax
from jax.experimental import pallas as pl
from jax.experimental.pallas import tpu as pltpu


def _round_up(x, m):
    return ((x + m - 1) // m) * m


def _pick_tile(padded, unit, max_tile):
    """Largest multiple of `unit` that divides `padded` and is <= max_tile."""
    q = padded // unit
    best = 1
    for d in range(1, q + 1):
        if q % d == 0 and d * unit <= max_tile:
            best = d
    return best * unit


def _conv_bn_relu_gemm_kernel(x_ref, w_ref, scale_ref, shift_ref, o_ref, acc_ref, *, relu):
    """One (tm, tn) output tile; K reduction runs on grid axis 2 (innermost).

    x_ref:     (tm, tk)  bf16 im2col patches
    w_ref:     (tn, tk)  bf16 conv weight rows (native PyTorch layout, no transpose)
    scale_ref: (1, tn)   f32 folded BN scale  = gamma / sqrt(var + eps)
    shift_ref: (1, tn)   f32 folded BN shift  = beta - mean*scale + conv_bias*scale
    o_ref:     (tm, tn)  f32 output tile
    acc_ref:   (tm, tn)  f32 accumulator scratch (persists across the K axis)
    """
    k = pl.program_id(2)

    @pl.when(k == 0)
    def _():
        acc_ref[...] = jnp.zeros_like(acc_ref)

    # Pure MXU accumulate in the inner loop: contract K of x against K of w
    # without materializing a transposed weight.
    acc_ref[...] += lax.dot_general(
        x_ref[...], w_ref[...],
        dimension_numbers=(((1,), (1,)), ((), ())),
        preferred_element_type=jnp.float32,
    )

    # Epilogue only on the last K step: bias/BN/ReLU exactly once.
    @pl.when(k == pl.num_programs(2) - 1)
    def _():
        y = acc_ref[...] * scale_ref[...] + shift_ref[...]
        if relu:
            y = jnp.maximum(y, 0.0)
        o_ref[...] = y.astype(o_ref.dtype)


def std_conv(x, conv_w, conv_b, bn_gamma, bn_beta, bn_mean, bn_var,
             *, stride=1, pad=0, eps=1e-5, relu=True,
             tm=256, tn=256, tk=512):
    """Fused Conv2d + BatchNorm2d(eval) + ReLU forward.

    x:       (B, Cin, H, W)  float32
    conv_w:  (Cout, Cin, kh, kw)  (PyTorch layout)
    conv_b:  (Cout,) or None
    bn_*:    (Cout,) BatchNorm affine params and running stats
    Returns (B, Cout, Ho, Wo) float32.
    """
    B, Cin, H, W = x.shape
    Cout, _, kh, kw = conv_w.shape
    Ho = (H + 2 * pad - kh) // stride + 1
    Wo = (W + 2 * pad - kw) // stride + 1

    # ---- im2col (JAX glue; trace-time loop over kh*kw kernel positions) ----
    x_sp = jnp.pad(x, ((0, 0), (0, 0), (pad, pad), (pad, pad)))
    cols = []
    for i in range(kh):
        for j in range(kw):
            cols.append(x_sp[:, :, i:i + stride * (Ho - 1) + 1:stride,
                                   j:j + stride * (Wo - 1) + 1:stride])
    patches = jnp.stack(cols, axis=2)                       # (B, Cin, kh*kw, Ho, Wo)
    x_mat = patches.reshape(B, Cin * kh * kw, Ho * Wo)
    x_mat = x_mat.transpose(0, 2, 1).reshape(B * Ho * Wo, Cin * kh * kw)  # (M, K)

    w_mat = conv_w.reshape(Cout, Cin * kh * kw)             # (N, K) — kept untransposed

    # ---- Fold conv bias + BatchNorm (running stats) into per-channel scale/shift ----
    scale = bn_gamma / jnp.sqrt(bn_var + eps)               # (N,)
    shift = bn_beta - bn_mean * scale
    if conv_b is not None:
        shift = shift + conv_b * scale

    M, K = x_mat.shape
    N = Cout

    # ---- Tile selection + padding (lane-dense output, MXU-friendly tiles) ----
    K_pad = _round_up(K, 128)
    tk_eff = _pick_tile(K_pad, 128, max(tk, 128))
    N_pad = _round_up(N, 128)
    tn_eff = _pick_tile(N_pad, 128, max(tn, 128))
    M_pad = _round_up(M, 8)
    if M_pad <= tm:
        tm_eff = M_pad
    else:
        tm_eff = tm
        M_pad = _round_up(M_pad, tm_eff)

    # bf16 operands for the MXU (f32 accumulation inside the kernel).
    x_p = jnp.zeros((M_pad, K_pad), jnp.bfloat16).at[:M, :K].set(
        x_mat.astype(jnp.bfloat16))
    w_p = jnp.zeros((N_pad, K_pad), jnp.bfloat16).at[:N, :K].set(
        w_mat.astype(jnp.bfloat16))
    scale_p = jnp.zeros((1, N_pad), jnp.float32).at[0, :N].set(scale)
    shift_p = jnp.zeros((1, N_pad), jnp.float32).at[0, :N].set(shift)

    grid = (M_pad // tm_eff, N_pad // tn_eff, K_pad // tk_eff)

    kernel = functools.partial(_conv_bn_relu_gemm_kernel, relu=relu)

    flops = 2 * M_pad * N_pad * K_pad
    bytes_accessed = (M_pad * K_pad * 2 + N_pad * K_pad * 2
                      + M_pad * N_pad * 4 + 2 * N_pad * 4)

    out_mat = pl.pallas_call(
        kernel,
        out_shape=jax.ShapeDtypeStruct((M_pad, N_pad), jnp.float32),
        grid_spec=pltpu.PrefetchScalarGridSpec(
            num_scalar_prefetch=0,
            grid=grid,
            in_specs=[
                pl.BlockSpec((tm_eff, tk_eff), lambda i, j, k: (i, k)),   # patches
                pl.BlockSpec((tn_eff, tk_eff), lambda i, j, k: (j, k)),   # weight (N,K)
                pl.BlockSpec((1, tn_eff), lambda i, j, k: (0, j)),        # scale
                pl.BlockSpec((1, tn_eff), lambda i, j, k: (0, j)),        # shift
            ],
            out_specs=pl.BlockSpec((tm_eff, tn_eff), lambda i, j, k: (i, j)),
            scratch_shapes=[pltpu.VMEM((tm_eff, tn_eff), jnp.float32)],
        ),
        compiler_params=pltpu.CompilerParams(
            dimension_semantics=("parallel", "parallel", "arbitrary"),
            vmem_limit_bytes=64 * 1024 * 1024,
        ),
        cost_estimate=pl.CostEstimate(
            flops=flops, transcendentals=0, bytes_accessed=bytes_accessed),
    )(x_p, w_p, scale_p, shift_p)

    out = out_mat[:M, :N]                                   # strip padding
    out = out.reshape(B, Ho, Wo, N).transpose(0, 3, 1, 2)   # -> (B, Cout, Ho, Wo)
    # Dropout: eval-mode forward is identity (no-op).
    return out


if __name__ == "__main__":
    # Small shapes consistent with the module: batch=2, nin=4, nout=64, 3x3 conv,
    # stride 1, padding 1, 16x16 spatial.
    batch, nin, nout, kern, stride, pad, spatial = 2, 4, 64, 3, 1, 1, 16
    eps = 1e-5

    key = jax.random.PRNGKey(0)
    kx, kw, kb, kg, kbt, kmn, kvr = jax.random.split(key, 7)

    # nn.Conv2d default init: U(-1/sqrt(fan_in), 1/sqrt(fan_in)).
    fan_in = nin * kern * kern
    bound = 1.0 / jnp.sqrt(jnp.float32(fan_in))
    conv_w = jax.random.uniform(kw, (nout, nin, kern, kern), jnp.float32, -bound, bound)
    conv_b = jax.random.uniform(kb, (nout,), jnp.float32, -bound, bound)

    # BatchNorm params / running stats (inference mode).
    bn_gamma = jax.random.uniform(kg, (nout,), jnp.float32, 0.5, 1.5)
    bn_beta = jax.random.uniform(kbt, (nout,), jnp.float32, -0.5, 0.5)
    bn_mean = jax.random.normal(kmn, (nout,), jnp.float32) * 0.1
    bn_var = jax.random.uniform(kvr, (nout,), jnp.float32, 0.5, 1.5)

    x = jax.random.normal(kx, (batch, nin, spatial, spatial), jnp.float32)

    out = std_conv(x, conv_w, conv_b, bn_gamma, bn_beta, bn_mean, bn_var,
                   stride=stride, pad=pad, eps=eps, relu=True)
    jax.block_until_ready(out)

    # ---- Plain-JAX f32 reference: conv -> BN(eval) -> ReLU ----
    ref = lax.conv_general_dilated(
        x, conv_w, window_strides=(stride, stride),
        padding=[(pad, pad), (pad, pad)],
        dimension_numbers=("NCHW", "OIHW", "NCHW"))
    ref = ref + conv_b[None, :, None, None]
    ref_scale = (bn_gamma / jnp.sqrt(bn_var + eps))[None, :, None, None]
    ref = (ref - bn_mean[None, :, None, None]) * ref_scale + bn_beta[None, :, None, None]
    ref = jnp.maximum(ref, 0.0)

    assert out.shape == (batch, nout, spatial, spatial)
    # bf16 MXU inputs (f32 accumulation) => relaxed tolerance vs the f32 reference.
    assert jnp.allclose(out, ref, atol=5e-2, rtol=5e-2), float(jnp.max(jnp.abs(out - ref)))

    print("KERNEL_OK")
</pallas_src>

<mosaic_0001>
module attributes {stable_mosaic.version = 11 : i64} {
  func.func @_conv_bn_relu_gemm_kernel(%arg0: i32, %arg1: i32, %arg2: i32, %arg3: memref<256x128xbf16, #tpu.memory_space<vmem>>, %arg4: memref<128x128xbf16, #tpu.memory_space<vmem>>, %arg5: memref<1x128xf32, #tpu.memory_space<vmem>>, %arg6: memref<1x128xf32, #tpu.memory_space<vmem>>, %arg7: memref<256x128xf32, #tpu.memory_space<vmem>>, %arg8: memref<256x128xf32, #tpu.memory_space<vmem>>) attributes {dimension_semantics = [#tpu.dimension_semantics<parallel>, #tpu.dimension_semantics<parallel>, #tpu.dimension_semantics<arbitrary>], iteration_bounds = array<i64: 2, 1, 1>, scalar_prefetch = 0 : i64, scratch_operands = 1 : i64, tpu.core_type = #tpu.core_type<tc>, window_params = [{transform_indices = @transform_0, window_bounds = array<i64: 256, 128>}, {transform_indices = @transform_1, window_bounds = array<i64: 128, 128>}, {transform_indices = @transform_2, window_bounds = array<i64: 1, 128>}, {transform_indices = @transform_3, window_bounds = array<i64: 1, 128>}, {transform_indices = @transform_4, window_bounds = array<i64: 256, 128>}]} {
    %c0_i32 = arith.constant 0 : i32
    %0 = arith.cmpi eq, %arg2, %c0_i32 : i32
    %1 = arith.extui %0 : i1 to i32
    %c0_i32_0 = arith.constant 0 : i32
    %2 = arith.cmpi ne, %1, %c0_i32_0 : i32
    scf.if %2 {
      %cst_10 = arith.constant 0.000000e+00 : f32
      %12 = vector.broadcast %cst_10 : f32 to vector<256x128xf32>
      %c0_11 = arith.constant 0 : index
      %c0_12 = arith.constant 0 : index
      %13 = vector.load %arg8[%c0_11, %c0_12] : memref<256x128xf32, #tpu.memory_space<vmem>>, vector<256x128xf32>
      tpu.vector_store %arg8[%c0_11, %c0_12], %12 {strides = array<i32>} : memref<256x128xf32, #tpu.memory_space<vmem>>, vector<256x128xf32>,
    } else {
    }
    %c0 = arith.constant 0 : index
    %c0_1 = arith.constant 0 : index
    %3 = vector.load %arg8[%c0, %c0_1] : memref<256x128xf32, #tpu.memory_space<vmem>>, vector<256x128xf32>
    %c0_2 = arith.constant 0 : index
    %c0_3 = arith.constant 0 : index
    %4 = vector.load %arg3[%c0_2, %c0_3] : memref<256x128xbf16, #tpu.memory_space<vmem>>, vector<256x128xbf16>
    %c0_4 = arith.constant 0 : index
    %c0_5 = arith.constant 0 : index
    %5 = vector.load %arg4[%c0_4, %c0_5] : memref<128x128xbf16, #tpu.memory_space<vmem>>, vector<128x128xbf16>
    %cst = arith.constant dense<0.000000e+00> : vector<256x128xf32>
    %6 = tpu.matmul %4, %5, %cst {dimension_numbers = #tpu.dot_dimension_numbers<[1], [1], [0], [0], [0, 0, 1, 0], [], []>} : vector<256x128xbf16>, vector<128x128xbf16>, vector<256x128xf32> -> vector<256x128xf32>
    %7 = arith.addf %3, %6 : vector<256x128xf32>
    %c0_6 = arith.constant 0 : index
    %c0_7 = arith.constant 0 : index
    %8 = vector.load %arg8[%c0_6, %c0_7] : memref<256x128xf32, #tpu.memory_space<vmem>>, vector<256x128xf32>
    tpu.vector_store %arg8[%c0_6, %c0_7], %7 {strides = array<i32>} : memref<256x128xf32, #tpu.memory_space<vmem>>, vector<256x128xf32>,
    %c0_i32_8 = arith.constant 0 : i32
    %9 = arith.cmpi eq, %arg2, %c0_i32_8 : i32
    %10 = arith.extui %9 : i1 to i32
    %c0_i32_9 = arith.constant 0 : i32
    %11 = arith.cmpi ne, %10, %c0_i32_9 : i32
    scf.if %11 {
      %c0_10 = arith.constant 0 : index
      %c0_11 = arith.constant 0 : index
      %12 = vector.load %arg8[%c0_10, %c0_11] : memref<256x128xf32, #tpu.memory_space<vmem>>, vector<256x128xf32>
      %c0_12 = arith.constant 0 : index
      %c0_13 = arith.constant 0 : index
      %13 = vector.load %arg5[%c0_12, %c0_13] : memref<1x128xf32, #tpu.memory_space<vmem>>, vector<1x128xf32>
      %14 = vector.broadcast %13 : vector<1x128xf32> to vector<256x128xf32>
      %15 = arith.mulf %12, %14 : vector<256x128xf32>
      %c0_14 = arith.constant 0 : index
      %c0_15 = arith.constant 0 : index
      %16 = vector.load %arg6[%c0_14, %c0_15] : memref<1x128xf32, #tpu.memory_space<vmem>>, vector<1x128xf32>
      %17 = vector.broadcast %16 : vector<1x128xf32> to vector<256x128xf32>
      %18 = arith.addf %15, %17 : vector<256x128xf32>
      %cst_16 = arith.constant 0.000000e+00 : f32
      %19 = vector.broadcast %cst_16 : f32 to vector<256x128xf32>
      %20 = arith.maximumf %18, %19 : vector<256x128xf32>
      %c0_17 = arith.constant 0 : index
      %c0_18 = arith.constant 0 : index
      %21 = vector.load %arg7[%c0_17, %c0_18] : memref<256x128xf32, #tpu.memory_space<vmem>>, vector<256x128xf32>
      tpu.vector_store %arg7[%c0_17, %c0_18], %20 {strides = array<i32>} : memref<256x128xf32, #tpu.memory_space<vmem>>, vector<256x128xf32>,
    } else {
    }
    return
  }
  func.func @transform_0(%arg0: i32, %arg1: i32, %arg2: i32) -> (i32, i32) {
    %c0_i32 = arith.constant 0 : i32
    return %arg0, %arg2 : i32, i32
  }
  func.func @transform_1(%arg0: i32, %arg1: i32, %arg2: i32) -> (i32, i32) {
    %c0_i32 = arith.constant 0 : i32
    return %arg1, %arg2 : i32, i32
  }
  func.func @transform_2(%arg0: i32, %arg1: i32, %arg2: i32) -> (i32, i32) {
    %c0_i32 = arith.constant 0 : i32
    %c0_i32_0 = arith.constant 0 : i32
    return %c0_i32, %arg1 : i32, i32
  }
  func.func @transform_3(%arg0: i32, %arg1: i32, %arg2: i32) -> (i32, i32) {
    %c0_i32 = arith.constant 0 : i32
    %c0_i32_0 = arith.constant 0 : i32
    return %c0_i32, %arg1 : i32, i32
  }
  func.func @transform_4(%arg0: i32, %arg1: i32, %arg2: i32) -> (i32, i32) {
    %c0_i32 = arith.constant 0 : i32
    return %arg0, %arg1 : i32, i32
  }
}

</mosaic_0001>

<llo_original>
// kernel: tpu_custom_call.1
$region0: #{tpu_custom_call.1}
  #allocation0 [shape = 'u32[]', space=smem, size = 0x4, offset = 0x4, fixed_abs, tag = 'smem constant byte address 0x4 - core index']
  #allocation1 [shape = 'u32[72,128]{1,0:T(1,128)}', space=vmem, size = 0x9000, scoped, tag = 'internal scratch']
  #allocation2 [shape = 'f32[256,128]{1,0:T(8,128)}', space=vmem, size = 0x20000, scoped, tag = 'scratch operand']
  %s0 = inlined_call_operand.hbm [shape: bf16[512,128], index: 0, kind: input, shape index: {}]
  %s1 = inlined_call_operand.hbm [shape: bf16[128,128], index: 1, kind: input, shape index: {}]
  %s2 = inlined_call_operand.vmem [shape: f32[1,128], index: 2, kind: input, shape index: {}]
  %s3 = inlined_call_operand.vmem [shape: f32[1,128], index: 3, kind: input, shape index: {}]
  %s4 = inlined_call_operand.hbm [shape: f32[512,128], index: 4, kind: output, shape index: {}]
  %s5 = sld [smem:[#allocation0]]
  $region65: #{tpu_custom_call.1} parent=0
    _
  %s7 = ssub.s32 1, %s5
  %s8 = scalar_select 0, %s7, %s5
  $region1: #{tpu_custom_call.1} parent=0
    #allocation3 [shape = 'u8[131072]{0}', space=vmem, size = 0x20000, scoped, tag = 'input window, operand 0']
    #allocation4 [shape = 's32[2]{0}', space=sflag, size = 0x8, scoped, tag = 'scoped memory for tpu_custom_call.1']
    #allocation5 [shape = 's32[2]{0}', space=sflag, size = 0x8, scoped, tag = 'scoped memory for tpu_custom_call.1']
    #allocation6 [shape = 'u8[32768]{0}', space=vmem, size = 0x8000, scoped, tag = 'input window, operand 1, single buffered']
    #allocation7 [shape = 's32[1]{0}', space=sflag, size = 0x4, scoped, tag = 'scoped memory for tpu_custom_call.1']
    #allocation8 [shape = 'u8[262144]{0}', space=vmem, size = 0x40000, scoped, tag = 'output window, operand 0']
    %9 = vsyncpa [#allocation4], 0
    %s10 = scalar_lea.sflag [#allocation4], 1
    %11 = vsyncpa %s10, 0
    %12 = vsyncpa [#allocation7], 0
    %13 = vsyncpa [#allocation5], 0
    %s14 = scalar_lea.sflag [#allocation5], 1
    %15 = vsyncpa %s14, 0
    loop: start=0, step=1, limit=4
    $region2: #{tpu_custom_call.1} parent=1 // loop_pre_header
      _
    $region3: #{tpu_custom_call.1} parent=1 // loop_header
      %s17 = sphi 0, %s21
      %p18 = scmp.ge.s32.totalorder %s17, 4
      %s24 = sphi 0, %s43
      %s25 = sphi 0, %s39
      %s26 = sphi 0, %s35
      %s27 = sphi 0, %s24
      %s28 = sphi 0, %s25
      %s29 = sphi 0, %s26
      %s30 = sphi 0, %s27
      %s31 = sphi 0, %s28
      %s32 = sphi 0, %s29
      %s48 = sphi 0, %s50
      %s51 = sphi 0, %s48
      %s52 = sphi 0, %s51
      %s68 = sphi 0, %s52
      %s76 = sphi 0, %s78
      %s79 = sphi 0, %s76
      %s80 = sphi 0, %s79
      %s96 = sphi 0, %s80
      %s102 = sphi 0, %s104
      %s105 = sphi 0, %s102
      %s106 = sphi 0, %s105
      %s122 = sphi 0, %s106
      %s128 = sphi 0, %s130
      %s131 = sphi 0, %s128
      %s132 = sphi 0, %s131
      %s148 = sphi 0, %s132
      %s156 = sphi 0, %s158
      %s159 = sphi 0, %s156
      %s160 = sphi 0, %s159
      %s176 = sphi 0, %s160
    $region4: #{tpu_custom_call.1} parent=1 // loop_header_branch
      %20 = sbr.rel (%p18) target = $region8
    $region5: #{tpu_custom_call.1} parent=1 // loop_body
      %s22 = ssub.s32 %s17, 1
      %s23 = ssub.s32 %s17, 2
      %s33 = sadd.s32 1, %s26
      %p34 = scmp.ge.s32.totalorder %s33, 1
      %s35 = scalar_select %p34, 0, %s33
      %s36 = sadd.s32 1, %s25
      %s37 = scalar_select %p34, %s36, %s25
      %p38 = scmp.ge.s32.totalorder %s37, 1
      %s39 = scalar_select %p38, 0, %s37
      %s40 = sadd.s32 1, %s24
      %s41 = scalar_select %p38, %s40, %s24
      %p42 = scmp.ge.s32.totalorder %s41, 2
      %s43 = scalar_select %p42, 0, %s41
      %s44 = ssub.s32 %s24, %s43
      %s45 = ssub.s32 %s26, %s35
      %s46 = sor.u32 %s44, %s45
      %p47 = scmp.eq.s32.totalorder %s46, 0
      %s49 = sadd.s32 %s48, 1
      %s50 = scalar_select %p47, %s48, %s49
      %p53 = pneg %p47
      %p54 = scmp.eq.s32.totalorder %s17, 1
      %p55 = por %p53, %p54
      %p56 = scmp.ne.s32.totalorder %s48, %s51
      %p57 = scmp.eq.s32.totalorder %s17, 0
      %p58 = por %p56, %p57
      %p59 = scmp.ne.s32.totalorder %s48, %s51
      %p60 = scmp.eq.s32.totalorder %s22, 1
      %p61 = por %p59, %p60
      %p62 = scmp.ne.s32.totalorder %s51, %s52
      %p63 = scmp.eq.s32.totalorder %s22, 0
      %p64 = por %p62, %p63
      %p65 = scmp.ne.s32.totalorder %s51, %s52
      %p66 = scmp.eq.s32.totalorder %s23, 1
      %p67 = por %p65, %p66
      %p69 = scmp.ne.s32.totalorder %s52, %s68
      %p70 = scmp.eq.s32.totalorder %s23, 0
      %p71 = por %p69, %p70
      %s72 = ssub.s32 %s25, %s39
      %s73 = ssub.s32 %s26, %s35
      %s74 = sor.u32 %s72, %s73
      %p75 = scmp.eq.s32.totalorder %s74, 0
      %s77 = sadd.s32 %s76, 1
      %s78 = scalar_select %p75, %s76, %s77
      %p81 = pneg %p75
      %p82 = scmp.eq.s32.totalorder %s17, 1
      %p83 = por %p81, %p82
      %p84 = scmp.ne.s32.totalorder %s76, %s79
      %p85 = scmp.eq.s32.totalorder %s17, 0
      %p86 = por %p84, %p85
      %p87 = scmp.ne.s32.totalorder %s76, %s79
      %p88 = scmp.eq.s32.totalorder %s22, 1
      %p89 = por %p87, %p88
      %p90 = scmp.ne.s32.totalorder %s79, %s80
      %p91 = scmp.eq.s32.totalorder %s22, 0
      %p92 = por %p90, %p91
      %p93 = scmp.ne.s32.totalorder %s79, %s80
      %p94 = scmp.eq.s32.totalorder %s23, 1
      %p95 = por %p93, %p94
      %p97 = scmp.ne.s32.totalorder %s80, %s96
      %p98 = scmp.eq.s32.totalorder %s23, 0
      %p99 = por %p97, %p98
      %s100 = ssub.s32 %s25, %s39
      %p101 = scmp.eq.s32.totalorder %s100, 0
      %s103 = sadd.s32 %s102, 1
      %s104 = scalar_select %p101, %s102, %s103
      %p107 = pneg %p101
      %p108 = scmp.eq.s32.totalorder %s17, 1
      %p109 = por %p107, %p108
      %p110 = scmp.ne.s32.totalorder %s102, %s105
      %p111 = scmp.eq.s32.totalorder %s17, 0
      %p112 = por %p110, %p111
      %p113 = scmp.ne.s32.totalorder %s102, %s105
      %p114 = scmp.eq.s32.totalorder %s22, 1
      %p115 = por %p113, %p114
      %p116 = scmp.ne.s32.totalorder %s105, %s106
      %p117 = scmp.eq.s32.totalorder %s22, 0
      %p118 = por %p116, %p117
      %p119 = scmp.ne.s32.totalorder %s105, %s106
      %p120 = scmp.eq.s32.totalorder %s23, 1
      %p121 = por %p119, %p120
      %p123 = scmp.ne.s32.totalorder %s106, %s122
      %p124 = scmp.eq.s32.totalorder %s23, 0
      %p125 = por %p123, %p124
      %s126 = ssub.s32 %s25, %s39
      %p127 = scmp.eq.s32.totalorder %s126, 0
      %s129 = sadd.s32 %s128, 1
      %s130 = scalar_select %p127, %s128, %s129
      %p133 = pneg %p127
      %p134 = scmp.eq.s32.totalorder %s17, 1
      %p135 = por %p133, %p134
      %p136 = scmp.ne.s32.totalorder %s128, %s131
      %p137 = scmp.eq.s32.totalorder %s17, 0
      %p138 = por %p136, %p137
      %p139 = scmp.ne.s32.totalorder %s128, %s131
      %p140 = scmp.eq.s32.totalorder %s22, 1
      %p141 = por %p139, %p140
      %p142 = scmp.ne.s32.totalorder %s131, %s132
      %p143 = scmp.eq.s32.totalorder %s22, 0
      %p144 = por %p142, %p143
      %p145 = scmp.ne.s32.totalorder %s131, %s132
      %p146 = scmp.eq.s32.totalorder %s23, 1
      %p147 = por %p145, %p146
      %p149 = scmp.ne.s32.totalorder %s132, %s148
      %p150 = scmp.eq.s32.totalorder %s23, 0
      %p151 = por %p149, %p150
      %s152 = ssub.s32 %s24, %s43
      %s153 = ssub.s32 %s25, %s39
      %s154 = sor.u32 %s152, %s153
      %p155 = scmp.eq.s32.totalorder %s154, 0
      %s157 = sadd.s32 %s156, 1
      %s158 = scalar_select %p155, %s156, %s157
      %p161 = pneg %p155
      %p162 = scmp.eq.s32.totalorder %s17, 1
      %p163 = por %p161, %p162
      %p164 = scmp.ne.s32.totalorder %s156, %s159
      %p165 = scmp.eq.s32.totalorder %s17, 0
      %p166 = por %p164, %p165
      %p167 = scmp.ne.s32.totalorder %s156, %s159
      %p168 = scmp.eq.s32.totalorder %s22, 1
      %p169 = por %p167, %p168
      %p170 = scmp.ne.s32.totalorder %s159, %s160
      %p171 = scmp.eq.s32.totalorder %s22, 0
      %p172 = por %p170, %p171
      %p173 = scmp.ne.s32.totalorder %s159, %s160
      %p174 = scmp.eq.s32.totalorder %s23, 1
      %p175 = por %p173, %p174
      %p177 = scmp.ne.s32.totalorder %s160, %s176
      %p178 = scmp.eq.s32.totalorder %s23, 0
      %p179 = por %p177, %p178
      %p180 = scmp.le.s32.totalorder 1, %s17
      %p181 = scmp.lt.s32.totalorder %s17, 3
      %p182 = pnand %p180, %p181
      %p183 = pneg %p182
      // Predicated region
      $region9: #{tpu_custom_call.1} parent=5 // pred_check
        _
      $region10: #{tpu_custom_call.1} parent=5 // pred_check_branch
        %185 = sbr.rel (%p182) target = $region12
      $region11: #{tpu_custom_call.1} parent=5 // pred_region
        %s186 = ssub.s32 %s17, 1
        // Predicated region
        $region13: #{tpu_custom_call.1} parent=11 // pred_check
          %p187 = pneg %p92
        $region14: #{tpu_custom_call.1} parent=11 // pred_check_branch
          %189 = sbr.rel (%p187) target = $region16
        $region15: #{tpu_custom_call.1} parent=11 // pred_region
          %s190 = smul.u32 16, %s28
          %192 = vsyncadd [#allocation7], 0
          %s193 = sadd.s32 %s29, %s190
          %s194 = smul.addr %s193, 4
          %s195 = scalar_lea.hbm %s1, %s194
          %s196 = sshll.u32 %s195, 4
          %s197 = int_to_ptr.hbm [resolvable:$true] %s196
          %s198 = sshll.u32 [#allocation6], 4
          %s199 = int_to_ptr.vmem [resolvable:$true] %s198
          %204 = dma.hbm_to_vmem [thread:$0]  %s197, 1024, %s199, [#allocation7], 64, 64, 4
        $region16: #{tpu_custom_call.1} parent=11 // pred_fallthru
          _
        // Predicated region
        $region17: #{tpu_custom_call.1} parent=11 // pred_check
          %p205 = pneg %p118
        $region18: #{tpu_custom_call.1} parent=11 // pred_check_branch
          %207 = sbr.rel (%p205) target = $region20
        $region19: #{tpu_custom_call.1} parent=11 // pred_region
          %p208 = scmp.lt.s32.totalorder %s28, 0
          %s209 = scalar_select %p208, %s28, 0
          %s210 = scalar_lea.vmem %s2, %s209
        $region20: #{tpu_custom_call.1} parent=11 // pred_fallthru
          _
        // Predicated region
        $region21: #{tpu_custom_call.1} parent=11 // pred_check
          %p211 = pneg %p144
        $region22: #{tpu_custom_call.1} parent=11 // pred_check_branch
          %213 = sbr.rel (%p211) target = $region24
        $region23: #{tpu_custom_call.1} parent=11 // pred_region
          %p214 = scmp.lt.s32.totalorder %s28, 0
          %s215 = scalar_select %p214, %s28, 0
          %s216 = scalar_lea.vmem %s3, %s215
        $region24: #{tpu_custom_call.1} parent=11 // pred_fallthru
          _
      $region12: #{tpu_custom_call.1} parent=5 // pred_fallthru
        _
      %p217 = scmp.lt.s32.totalorder %s17, 2
      // Predicated region
      $region25: #{tpu_custom_call.1} parent=5 // pred_check
        %p218 = pneg %p217
      $region26: #{tpu_custom_call.1} parent=5 // pred_check_branch
        %220 = sbr.rel (%p218) target = $region28
      $region27: #{tpu_custom_call.1} parent=5 // pred_region
        // Predicated region
        $region29: #{tpu_custom_call.1} parent=27 // pred_check
          %p221 = pneg %p58
        $region30: #{tpu_custom_call.1} parent=27 // pred_check_branch
          %223 = sbr.rel (%p221) target = $region32
        $region31: #{tpu_custom_call.1} parent=27 // pred_region
          %s224 = sand.u32 %s48, 1
          %s225 = scalar_lea.sflag [#allocation4], %s224
          %s226 = sand.u32 %s48, 1
          %s227 = smul.addr %s226, 128
          %s228 = scalar_lea.vmem [#allocation3], %s227
          %s229 = smul.u32 32, %s24
          %231 = vsyncadd %s225, 0
          %s232 = sadd.s32 %s26, %s229
          %s233 = smul.addr %s232, 4
          %s234 = scalar_lea.hbm %s0, %s233
          %s235 = sshll.u32 %s234, 4
          %s236 = int_to_ptr.hbm [resolvable:$true] %s235
          %s237 = sshll.u32 %s228, 4
          %s238 = int_to_ptr.vmem [resolvable:$true] %s237
          %243 = dma.hbm_to_vmem [thread:$0]  %s236, 2048, %s238, %s225, 64, 64, 4
        $region32: #{tpu_custom_call.1} parent=27 // pred_fallthru
          _
      $region28: #{tpu_custom_call.1} parent=5 // pred_fallthru
        _
      %p244 = scmp.le.s32.totalorder 1, %s17
      %p245 = scmp.lt.s32.totalorder %s17, 3
      %p246 = pnand %p244, %p245
      %p247 = pneg %p246
      // Predicated region
      $region33: #{tpu_custom_call.1} parent=5 // pred_check
        _
      $region34: #{tpu_custom_call.1} parent=5 // pred_check_branch
        %249 = sbr.rel (%p246) target = $region36
      $region35: #{tpu_custom_call.1} parent=5 // pred_region
        %s250 = ssub.s32 %s17, 1
        %s251 = sand.u32 %s51, 1
        %s252 = scalar_lea.sflag [#allocation4], %s251
        %s253 = sand.u32 %s51, 1
        %s254 = smul.addr %s253, 128
        %s255 = scalar_lea.vmem [#allocation3], %s254
        // Predicated region
        $region37: #{tpu_custom_call.1} parent=35 // pred_check
          %p256 = pneg %p64
        $region38: #{tpu_custom_call.1} parent=35 // pred_check_branch
          %258 = sbr.rel (%p256) target = $region40
        $region39: #{tpu_custom_call.1} parent=35 // pred_region
          %260 = dma.done %s252, 2048
        $region40: #{tpu_custom_call.1} parent=35 // pred_fallthru
          _
        // Predicated region
        $region41: #{tpu_custom_call.1} parent=35 // pred_check
          %p261 = pneg %p92
        $region42: #{tpu_custom_call.1} parent=35 // pred_check_branch
          %263 = sbr.rel (%p261) target = $region44
        $region43: #{tpu_custom_call.1} parent=35 // pred_region
          %265 = dma.done [#allocation7], 1024
        $region44: #{tpu_custom_call.1} parent=35 // pred_fallthru
          _
        %s266 = sand.u32 %s51, 1
        %s267 = scalar_lea.sflag [#allocation4], %s266
        %s268 = sand.u32 %s51, 1
        %s269 = smul.addr %s268, 128
        %s270 = scalar_lea.vmem [#allocation3], %s269
        %p271 = pneg %p64
        %p272 = pneg %p61
        %p273 = pneg %p92
        %p274 = pneg %p89
        %p275 = scmp.lt.s32.totalorder %s28, 0
        %s276 = scalar_select %p275, %s28, 0
        %s277 = scalar_lea.vmem %s2, %s276
        %p278 = pneg %p118
        %p279 = pneg %p115
        %p280 = scmp.lt.s32.totalorder %s28, 0
        %s281 = scalar_select %p280, %s28, 0
        %s282 = scalar_lea.vmem %s3, %s281
        %p283 = pneg %p144
        %p284 = pneg %p141
        %p285 = pneg %p172
        %p286 = pneg %p169
        %s287 = sand.u32 %s159, 1
        %s288 = scalar_lea.sflag [#allocation5], %s287
        %s289 = sand.u32 %s159, 1
        %s290 = smul.addr %s289, 256
        %s291 = scalar_lea.vmem [#allocation8], %s290
        %s292 = smul.u32 32, %s27
        %s293 = smul.u32 16, %s28
        %p294 = scmp.lt.s32.totalorder %s28, 0
        %s295 = scalar_select %p294, %s28, 0
        %s296 = scalar_lea.vmem %s2, %s295
        %p297 = scmp.lt.s32.totalorder %s28, 0
        %s298 = scalar_select %p297, %s28, 0
        %s299 = scalar_lea.vmem %s3, %s298
        %s300 = smul.u32 32, %s27
        %p301 = scmp.eq.s32.totalorder %s29, 0
        // Predicated region
        $region45: #{tpu_custom_call.1} parent=35 // pred_check
          %p302 = pneg %p301
        $region46: #{tpu_custom_call.1} parent=35 // pred_check_branch
          %304 = sbr.rel (%p302) target = $region48
        $region47: #{tpu_custom_call.1} parent=35 // pred_region
          %305 = vst [vmem:[#allocation2] sm:$0xff] 0.0
          %306 = vst [vmem:[#allocation2 + $0x8] sm:$0xff] 0.0
          %307 = vst [vmem:[#allocation2 + $0x10] sm:$0xff] 0.0
          %308 = vst [vmem:[#allocation2 + $0x18] sm:$0xff] 0.0
          %309 = vst [vmem:[#allocation2 + $0x20] sm:$0xff] 0.0
          %310 = vst [vmem:[#allocation2 + $0x28] sm:$0xff] 0.0
          %311 = vst [vmem:[#allocation2 + $0x30] sm:$0xff] 0.0
          %312 = vst [vmem:[#allocation2 + $0x38] sm:$0xff] 0.0
          %313 = vst [vmem:[#allocation2 + $0x40] sm:$0xff] 0.0
          %314 = vst [vmem:[#allocation2 + $0x48] sm:$0xff] 0.0
          %315 = vst [vmem:[#allocation2 + $0x50] sm:$0xff] 0.0
          %316 = vst [vmem:[#allocation2 + $0x58] sm:$0xff] 0.0
          %317 = vst [vmem:[#allocation2 + $0x60] sm:$0xff] 0.0
          %318 = vst [vmem:[#allocation2 + $0x68] sm:$0xff] 0.0
          %319 = vst [vmem:[#allocation2 + $0x70] sm:$0xff] 0.0
          %320 = vst [vmem:[#allocation2 + $0x78] sm:$0xff] 0.0
          %321 = vst [vmem:[#allocation2 + $0x80] sm:$0xff] 0.0
          %322 = vst [vmem:[#allocation2 + $0x88] sm:$0xff] 0.0
          %323 = vst [vmem:[#allocation2 + $0x90] sm:$0xff] 0.0
          %324 = vst [vmem:[#allocation2 + $0x98] sm:$0xff] 0.0
          %325 = vst [vmem:[#allocation2 + $0xa0] sm:$0xff] 0.0
          %326 = vst [vmem:[#allocation2 + $0xa8] sm:$0xff] 0.0
          %327 = vst [vmem:[#allocation2 + $0xb0] sm:$0xff] 0.0
          %328 = vst [vmem:[#allocation2 + $0xb8] sm:$0xff] 0.0
          %329 = vst [vmem:[#allocation2 + $0xc0] sm:$0xff] 0.0
          %330 = vst [vmem:[#allocation2 + $0xc8] sm:$0xff] 0.0
          %331 = vst [vmem:[#allocation2 + $0xd0] sm:$0xff] 0.0
          %332 = vst [vmem:[#allocation2 + $0xd8] sm:$0xff] 0.0
          %333 = vst [vmem:[#allocation2 + $0xe0] sm:$0xff] 0.0
          %334 = vst [vmem:[#allocation2 + $0xe8] sm:$0xff] 0.0
          %335 = vst [vmem:[#allocation2 + $0xf0] sm:$0xff] 0.0
          %336 = vst [vmem:[#allocation2 + $0xf8] sm:$0xff] 0.0
        $region48: #{tpu_custom_call.1} parent=35 // pred_fallthru
          _
        %v337 = vld [vmem:[#allocation2] sm:$0xff]
        %v338 = vld [vmem:[#allocation2 + $0x8] sm:$0xff]
        %v339 = vld [vmem:[#allocation2 + $0x10] sm:$0xff]
        %v340 = vld [vmem:[#allocation2 + $0x18] sm:$0xff]
        %v341 = vld [vmem:[#allocation2 + $0x20] sm:$0xff]
        %v342 = vld [vmem:[#allocation2 + $0x28] sm:$0xff]
        %v343 = vld [vmem:[#allocation2 + $0x30] sm:$0xff]
        %v344 = vld [vmem:[#allocation2 + $0x38] sm:$0xff]
        %v345 = vld [vmem:[#allocation2 + $0x40] sm:$0xff]
        %v346 = vld [vmem:[#allocation2 + $0x48] sm:$0xff]
        %v347 = vld [vmem:[#allocation2 + $0x50] sm:$0xff]
        %v348 = vld [vmem:[#allocation2 + $0x58] sm:$0xff]
        %v349 = vld [vmem:[#allocation2 + $0x60] sm:$0xff]
        %v350 = vld [vmem:[#allocation2 + $0x68] sm:$0xff]
        %v351 = vld [vmem:[#allocation2 + $0x70] sm:$0xff]
        %v352 = vld [vmem:[#allocation2 + $0x78] sm:$0xff]
        %v353 = vld [vmem:[#allocation2 + $0x80] sm:$0xff]
        %v354 = vld [vmem:[#allocation2 + $0x88] sm:$0xff]
        %v355 = vld [vmem:[#allocation2 + $0x90] sm:$0xff]
        %v356 = vld [vmem:[#allocation2 + $0x98] sm:$0xff]
        %v357 = vld [vmem:[#allocation2 + $0xa0] sm:$0xff]
        %v358 = vld [vmem:[#allocation2 + $0xa8] sm:$0xff]
        %v359 = vld [vmem:[#allocation2 + $0xb0] sm:$0xff]
        %v360 = vld [vmem:[#allocation2 + $0xb8] sm:$0xff]
        %v361 = vld [vmem:[#allocation2 + $0xc0] sm:$0xff]
        %v362 = vld [vmem:[#allocation2 + $0xc8] sm:$0xff]
        %v363 = vld [vmem:[#allocation2 + $0xd0] sm:$0xff]
        %v364 = vld [vmem:[#allocation2 + $0xd8] sm:$0xff]
        %v365 = vld [vmem:[#allocation2 + $0xe0] sm:$0xff]
        %v366 = vld [vmem:[#allocation2 + $0xe8] sm:$0xff]
        %v367 = vld [vmem:[#allocation2 + $0xf0] sm:$0xff]
        %v368 = vld [vmem:[#allocation2 + $0xf8] sm:$0xff]
        %v369 = vld [vmem:[%s255] sm:$0xf]
        %v370 = vld [vmem:[%s255 + $0x4] sm:$0xf]
        %v371 = vld [vmem:[%s255 + $0x8] sm:$0xf]
        %v372 = vld [vmem:[%s255 + $0xc] sm:$0xf]
        %v373 = vld [vmem:[%s255 + $0x10] sm:$0xf]
        %v374 = vld [vmem:[%s255 + $0x14] sm:$0xf]
        %v375 = vld [vmem:[%s255 + $0x18] sm:$0xf]
        %v376 = vld [vmem:[%s255 + $0x1c] sm:$0xf]
        %v377 = vld [vmem:[%s255 + $0x20] sm:$0xf]
        %v378 = vld [vmem:[%s255 + $0x24] sm:$0xf]
        %v379 = vld [vmem:[%s255 + $0x28] sm:$0xf]
        %v380 = vld [vmem:[%s255 + $0x2c] sm:$0xf]
        %v381 = vld [vmem:[%s255 + $0x30] sm:$0xf]
        %v382 = vld [vmem:[%s255 + $0x34] sm:$0xf]
        %v383 = vld [vmem:[%s255 + $0x38] sm:$0xf]
        %v384 = vld [vmem:[%s255 + $0x3c] sm:$0xf]
        %v385 = vld [vmem:[%s255 + $0x40] sm:$0xf]
        %v386 = vld [vmem:[%s255 + $0x44] sm:$0xf]
        %v387 = vld [vmem:[%s255 + $0x48] sm:$0xf]
        %v388 = vld [vmem:[%s255 + $0x4c] sm:$0xf]
        %v389 = vld [vmem:[%s255 + $0x50] sm:$0xf]
        %v390 = vld [vmem:[%s255 + $0x54] sm:$0xf]
        %v391 = vld [vmem:[%s255 + $0x58] sm:$0xf]
        %v392 = vld [vmem:[%s255 + $0x5c] sm:$0xf]
        %v393 = vld [vmem:[%s255 + $0x60] sm:$0xf]
        %v394 = vld [vmem:[%s255 + $0x64] sm:$0xf]
        %v395 = vld [vmem:[%s255 + $0x68] sm:$0xf]
        %v396 = vld [vmem:[%s255 + $0x6c] sm:$0xf]
        %v397 = vld [vmem:[%s255 + $0x70] sm:$0xf]
        %v398 = vld [vmem:[%s255 + $0x74] sm:$0xf]
        %v399 = vld [vmem:[%s255 + $0x78] sm:$0xf]
        %v400 = vld [vmem:[%s255 + $0x7c] sm:$0xf]
        %v401 = vld [vmem:[#allocation6] sm:$0xf]
        %v402 = vld [vmem:[#allocation6 + $0x4] sm:$0xf]
        %v403 = vld [vmem:[#allocation6 + $0x8] sm:$0xf]
        %v404 = vld [vmem:[#allocation6 + $0xc] sm:$0xf]
        %v405 = vld [vmem:[#allocation6 + $0x10] sm:$0xf]
        %v406 = vld [vmem:[#allocation6 + $0x14] sm:$0xf]
        %v407 = vld [vmem:[#allocation6 + $0x18] sm:$0xf]
        %v408 = vld [vmem:[#allocation6 + $0x1c] sm:$0xf]
        %v409 = vld [vmem:[#allocation6 + $0x20] sm:$0xf]
        %v410 = vld [vmem:[#allocation6 + $0x24] sm:$0xf]
        %v411 = vld [vmem:[#allocation6 + $0x28] sm:$0xf]
        %v412 = vld [vmem:[#allocation6 + $0x2c] sm:$0xf]
        %v413 = vld [vmem:[#allocation6 + $0x30] sm:$0xf]
        %v414 = vld [vmem:[#allocation6 + $0x34] sm:$0xf]
        %v415 = vld [vmem:[#allocation6 + $0x38] sm:$0xf]
        %v416 = vld [vmem:[#allocation6 + $0x3c] sm:$0xf]
        %v449 = vunpack.c.l.b16 %v369
        %v450 = vunpack.c.l.b16 %v370
        %v451 = vunpack.c.l.b16 %v371
        %v452 = vunpack.c.l.b16 %v372
        %v453 = vunpack.c.l.b16 %v373
        %v454 = vunpack.c.l.b16 %v374
        %v455 = vunpack.c.l.b16 %v375
        %v456 = vunpack.c.l.b16 %v376
        %v457 = vunpack.c.l.b16 %v377
        %v458 = vunpack.c.l.b16 %v378
        %v459 = vunpack.c.l.b16 %v379
        %v460 = vunpack.c.l.b16 %v380
        %v461 = vunpack.c.l.b16 %v381
        %v462 = vunpack.c.l.b16 %v382
        %v463 = vunpack.c.l.b16 %v383
        %v464 = vunpack.c.l.b16 %v384
        %v465 = vunpack.c.l.b16 %v385
        %v466 = vunpack.c.l.b16 %v386
        %v467 = vunpack.c.l.b16 %v387
        %v468 = vunpack.c.l.b16 %v388
        %v469 = vunpack.c.l.b16 %v389
        %v470 = vunpack.c.l.b16 %v390
        %v471 = vunpack.c.l.b16 %v391
        %v472 = vunpack.c.l.b16 %v392
        %v473 = vunpack.c.l.b16 %v393
        %v474 = vunpack.c.l.b16 %v394
        %v475 = vunpack.c.l.b16 %v395
        %v476 = vunpack.c.l.b16 %v396
        %v477 = vunpack.c.l.b16 %v397
        %v478 = vunpack.c.l.b16 %v398
        %v479 = vunpack.c.l.b16 %v399
        %v480 = vunpack.c.l.b16 %v400
        %v481 = vpack.c.b16 %v450, %v449
        %v482 = vpack.c.b16 %v452, %v451
        %v483 = vpack.c.b16 %v454, %v453
        %v484 = vpack.c.b16 %v456, %v455
        %v485 = vpack.c.b16 %v458, %v457
        %v486 = vpack.c.b16 %v460, %v459
        %v487 = vpack.c.b16 %v462, %v461
        %v488 = vpack.c.b16 %v464, %v463
        %v489 = vpack.c.b16 %v466, %v465
        %v490 = vpack.c.b16 %v468, %v467
        %v491 = vpack.c.b16 %v470, %v469
        %v492 = vpack.c.b16 %v472, %v471
        %v493 = vpack.c.b16 %v474, %v473
        %v494 = vpack.c.b16 %v476, %v475
        %v495 = vpack.c.b16 %v478, %v477
        %v496 = vpack.c.b16 %v480, %v479
        %v529 = vunpack.c.l.b16 %v401
        %v530 = vunpack.c.l.b16 %v402
        %v531 = vunpack.c.l.b16 %v403
        %v532 = vunpack.c.l.b16 %v404
        %v533 = vunpack.c.l.b16 %v405
        %v534 = vunpack.c.l.b16 %v406
        %v535 = vunpack.c.l.b16 %v407
        %v536 = vunpack.c.l.b16 %v408
        %v537 = vunpack.c.l.b16 %v409
        %v538 = vunpack.c.l.b16 %v410
        %v539 = vunpack.c.l.b16 %v411
        %v540 = vunpack.c.l.b16 %v412
        %v541 = vunpack.c.l.b16 %v413
        %v542 = vunpack.c.l.b16 %v414
        %v543 = vunpack.c.l.b16 %v415
        %v544 = vunpack.c.l.b16 %v416
        %v545 = vpack.c.b16 %v530, %v529
        %v546 = vpack.c.b16 %v532, %v531
        %v547 = vpack.c.b16 %v534, %v533
        %v548 = vpack.c.b16 %v536, %v535
        %v549 = vpack.c.b16 %v538, %v537
        %v550 = vpack.c.b16 %v540, %v539
        %v551 = vpack.c.b16 %v542, %v541
        %v552 = vpack.c.b16 %v544, %v543
        %561 = vmatpush.bf16.xpose.msra.mxu0 %v552
        %562 = vmatpush.bf16.xpose.msra.mxu0 %v551
        %563 = vmatpush.bf16.xpose.msra.mxu0 %v550
        %564 = vmatpush.bf16.xpose.msra.mxu0 %v549
        %565 = vmatpush.bf16.xpose.msra.mxu0 %v548
        %566 = vmatpush.bf16.xpose.msra.mxu0 %v547
        %567 = vmatpush.bf16.xpose.msra.mxu0 %v546
        %568 = vmatpush.bf16.xpose.msra.mxu0 %v545
        %569 = vmatmul.bf16.gmra.mxu0 %v481
        %v570 = vpop.f32.mrf.mxu0
        %v571 = vadd.f32 0.0, %v570
        %v572 = vpop.f32.mrf.mxu0
        %v573 = vadd.f32 0.0, %v572
        %574 = vmatmul.bf16.gmra.mxu0 %v482
        %v575 = vpop.f32.mrf.mxu0
        %v576 = vadd.f32 0.0, %v575
        %v577 = vpop.f32.mrf.mxu0
        %v578 = vadd.f32 0.0, %v577
        %579 = vmatmul.bf16.gmra.mxu0 %v483
        %v580 = vpop.f32.mrf.mxu0
        %v581 = vadd.f32 0.0, %v580
        %v582 = vpop.f32.mrf.mxu0
        %v583 = vadd.f32 0.0, %v582
        %584 = vmatmul.bf16.gmra.mxu0 %v484
        %v585 = vpop.f32.mrf.mxu0
        %v586 = vadd.f32 0.0, %v585
        %v587 = vpop.f32.mrf.mxu0
        %v588 = vadd.f32 0.0, %v587
        %589 = vmatmul.bf16.gmra.mxu0 %v485
        %v590 = vpop.f32.mrf.mxu0
        %v591 = vadd.f32 0.0, %v590
        %v592 = vpop.f32.mrf.mxu0
        %v593 = vadd.f32 0.0, %v592
        %594 = vmatmul.bf16.gmra.mxu0 %v486
        %v595 = vpop.f32.mrf.mxu0
        %v596 = vadd.f32 0.0, %v595
        %v597 = vpop.f32.mrf.mxu0
        %v598 = vadd.f32 0.0, %v597
        %599 = vmatmul.bf16.gmra.mxu0 %v487
        %v600 = vpop.f32.mrf.mxu0
        %v601 = vadd.f32 0.0, %v600
        %v602 = vpop.f32.mrf.mxu0
        %v603 = vadd.f32 0.0, %v602
        %604 = vmatmul.bf16.gmra.mxu0 %v488
        %v605 = vpop.f32.mrf.mxu0
        %v606 = vadd.f32 0.0, %v605
        %v607 = vpop.f32.mrf.mxu0
        %v608 = vadd.f32 0.0, %v607
        %609 = vmatmul.bf16.gmra.mxu0 %v489
        %v610 = vpop.f32.mrf.mxu0
        %v611 = vadd.f32 0.0, %v610
        %v612 = vpop.f32.mrf.mxu0
        %v613 = vadd.f32 0.0, %v612
        %614 = vmatmul.bf16.gmra.mxu0 %v490
        %v615 = vpop.f32.mrf.mxu0
        %v616 = vadd.f32 0.0, %v615
        %v617 = vpop.f32.mrf.mxu0
        %v618 = vadd.f32 0.0, %v617
        %619 = vmatmul.bf16.gmra.mxu0 %v491
        %v620 = vpop.f32.mrf.mxu0
        %v621 = vadd.f32 0.0, %v620
        %v622 = vpop.f32.mrf.mxu0
        %v623 = vadd.f32 0.0, %v622
        %624 = vmatmul.bf16.gmra.mxu0 %v492
        %v625 = vpop.f32.mrf.mxu0
        %v626 = vadd.f32 0.0, %v625
        %v627 = vpop.f32.mrf.mxu0
        %v628 = vadd.f32 0.0, %v627
        %629 = vmatmul.bf16.gmra.mxu0 %v493
        %v630 = vpop.f32.mrf.mxu0
        %v631 = vadd.f32 0.0, %v630
        %v632 = vpop.f32.mrf.mxu0
        %v633 = vadd.f32 0.0, %v632
        %634 = vmatmul.bf16.gmra.mxu0 %v494
        %v635 = vpop.f32.mrf.mxu0
        %v636 = vadd.f32 0.0, %v635
        %v637 = vpop.f32.mrf.mxu0
        %v638 = vadd.f32 0.0, %v637
        %639 = vmatmul.bf16.gmra.mxu0 %v495
        %v640 = vpop.f32.mrf.mxu0
        %v641 = vadd.f32 0.0, %v640
        %v642 = vpop.f32.mrf.mxu0
        %v643 = vadd.f32 0.0, %v642
        %644 = vmatmul.bf16.gmra.mxu0 %v496
        %v645 = vpop.f32.mrf.mxu0
        %v646 = vadd.f32 0.0, %v645
        %v647 = vpop.f32.mrf.mxu0
        %v648 = vadd.f32 0.0, %v647
        %649 = vdwg.mxu0
        %v650 = vadd.f32 %v337, %v571
        %v651 = vadd.f32 %v338, %v573
        %v652 = vadd.f32 %v339, %v576
        %v653 = vadd.f32 %v340, %v578
        %v654 = vadd.f32 %v341, %v581
        %v655 = vadd.f32 %v342, %v583
        %v656 = vadd.f32 %v343, %v586
        %v657 = vadd.f32 %v344, %v588
        %v658 = vadd.f32 %v345, %v591
        %v659 = vadd.f32 %v346, %v593
        %v660 = vadd.f32 %v347, %v596
        %v661 = vadd.f32 %v348, %v598
        %v662 = vadd.f32 %v349, %v601
        %v663 = vadd.f32 %v350, %v603
        %v664 = vadd.f32 %v351, %v606
        %v665 = vadd.f32 %v352, %v608
        %v666 = vadd.f32 %v353, %v611
        %v667 = vadd.f32 %v354, %v613
        %v668 = vadd.f32 %v355, %v616
        %v669 = vadd.f32 %v356, %v618
        %v670 = vadd.f32 %v357, %v621
        %v671 = vadd.f32 %v358, %v623
        %v672 = vadd.f32 %v359, %v626
        %v673 = vadd.f32 %v360, %v628
        %v674 = vadd.f32 %v361, %v631
        %v675 = vadd.f32 %v362, %v633
        %v676 = vadd.f32 %v363, %v636
        %v677 = vadd.f32 %v364, %v638
        %v678 = vadd.f32 %v365, %v641
        %v679 = vadd.f32 %v366, %v643
        %v680 = vadd.f32 %v367, %v646
        %v681 = vadd.f32 %v368, %v648
        %682 = vst [vmem:[#allocation2] sm:$0xff] %v650
        %683 = vst [vmem:[#allocation2 + $0x8] sm:$0xff] %v651
        %684 = vst [vmem:[#allocation2 + $0x10] sm:$0xff] %v652
        %685 = vst [vmem:[#allocation2 + $0x18] sm:$0xff] %v653
        %686 = vst [vmem:[#allocation2 + $0x20] sm:$0xff] %v654
        %687 = vst [vmem:[#allocation2 + $0x28] sm:$0xff] %v655
        %688 = vst [vmem:[#allocation2 + $0x30] sm:$0xff] %v656
        %689 = vst [vmem:[#allocation2 + $0x38] sm:$0xff] %v657
        %690 = vst [vmem:[#allocation2 + $0x40] sm:$0xff] %v658
        %691 = vst [vmem:[#allocation2 + $0x48] sm:$0xff] %v659
        %692 = vst [vmem:[#allocation2 + $0x50] sm:$0xff] %v660
        %693 = vst [vmem:[#allocation2 + $0x58] sm:$0xff] %v661
        %694 = vst [vmem:[#allocation2 + $0x60] sm:$0xff] %v662
        %695 = vst [vmem:[#allocation2 + $0x68] sm:$0xff] %v663
        %696 = vst [vmem:[#allocation2 + $0x70] sm:$0xff] %v664
        %697 = vst [vmem:[#allocation2 + $0x78] sm:$0xff] %v665
        %698 = vst [vmem:[#allocation2 + $0x80] sm:$0xff] %v666
        %699 = vst [vmem:[#allocation2 + $0x88] sm:$0xff] %v667
        %700 = vst [vmem:[#allocation2 + $0x90] sm:$0xff] %v668
        %701 = vst [vmem:[#allocation2 + $0x98] sm:$0xff] %v669
        %702 = vst [vmem:[#allocation2 + $0xa0] sm:$0xff] %v670
        %703 = vst [vmem:[#allocation2 + $0xa8] sm:$0xff] %v671
        %704 = vst [vmem:[#allocation2 + $0xb0] sm:$0xff] %v672
        %705 = vst [vmem:[#allocation2 + $0xb8] sm:$0xff] %v673
        %706 = vst [vmem:[#allocation2 + $0xc0] sm:$0xff] %v674
        %707 = vst [vmem:[#allocation2 + $0xc8] sm:$0xff] %v675
        %708 = vst [vmem:[#allocation2 + $0xd0] sm:$0xff] %v676
        %709 = vst [vmem:[#allocation2 + $0xd8] sm:$0xff] %v677
        %710 = vst [vmem:[#allocation2 + $0xe0] sm:$0xff] %v678
        %711 = vst [vmem:[#allocation2 + $0xe8] sm:$0xff] %v679
        %712 = vst [vmem:[#allocation2 + $0xf0] sm:$0xff] %v680
        %713 = vst [vmem:[#allocation2 + $0xf8] sm:$0xff] %v681
        // Predicated region
        $region49: #{tpu_custom_call.1} parent=35 // pred_check
          %p714 = pneg %p301
        $region50: #{tpu_custom_call.1} parent=35 // pred_check_branch
          %716 = sbr.rel (%p714) target = $region52
        $region51: #{tpu_custom_call.1} parent=35 // pred_region
          %v717 = vld [vmem:[#allocation2] sm:$0xff]
          %v718 = vld [vmem:[#allocation2 + $0x8] sm:$0xff]
          %v719 = vld [vmem:[#allocation2 + $0x10] sm:$0xff]
          %v720 = vld [vmem:[#allocation2 + $0x18] sm:$0xff]
          %v721 = vld [vmem:[#allocation2 + $0x20] sm:$0xff]
          %v722 = vld [vmem:[#allocation2 + $0x28] sm:$0xff]
          %v723 = vld [vmem:[#allocation2 + $0x30] sm:$0xff]
          %v724 = vld [vmem:[#allocation2 + $0x38] sm:$0xff]
          %v725 = vld [vmem:[#allocation2 + $0x40] sm:$0xff]
          %v726 = vld [vmem:[#allocation2 + $0x48] sm:$0xff]
          %v727 = vld [vmem:[#allocation2 + $0x50] sm:$0xff]
          %v728 = vld [vmem:[#allocation2 + $0x58] sm:$0xff]
          %v729 = vld [vmem:[#allocation2 + $0x60] sm:$0xff]
          %v730 = vld [vmem:[#allocation2 + $0x68] sm:$0xff]
          %v731 = vld [vmem:[#allocation2 + $0x70] sm:$0xff]
          %v732 = vld [vmem:[#allocation2 + $0x78] sm:$0xff]
          %v733 = vld [vmem:[#allocation2 + $0x80] sm:$0xff]
          %v734 = vld [vmem:[#allocation2 + $0x88] sm:$0xff]
          %v735 = vld [vmem:[#allocation2 + $0x90] sm:$0xff]
          %v736 = vld [vmem:[#allocation2 + $0x98] sm:$0xff]
          %v737 = vld [vmem:[#allocation2 + $0xa0] sm:$0xff]
          %v738 = vld [vmem:[#allocation2 + $0xa8] sm:$0xff]
          %v739 = vld [vmem:[#allocation2 + $0xb0] sm:$0xff]
          %v740 = vld [vmem:[#allocation2 + $0xb8] sm:$0xff]
          %v741 = vld [vmem:[#allocation2 + $0xc0] sm:$0xff]
          %v742 = vld [vmem:[#allocation2 + $0xc8] sm:$0xff]
          %v743 = vld [vmem:[#allocation2 + $0xd0] sm:$0xff]
          %v744 = vld [vmem:[#allocation2 + $0xd8] sm:$0xff]
          %v745 = vld [vmem:[#allocation2 + $0xe0] sm:$0xff]
          %v746 = vld [vmem:[#allocation2 + $0xe8] sm:$0xff]
          %v747 = vld [vmem:[#allocation2 + $0xf0] sm:$0xff]
          %v748 = vld [vmem:[#allocation2 + $0xf8] sm:$0xff]
          %v749 = vld [vmem:[%s296] sm:$0x1]
          %v751 = vperm.slane %v749, 0
          %v753 = vmul.f32 %v717, %v751
          %v754 = vmul.f32 %v718, %v751
          %v755 = vmul.f32 %v719, %v751
          %v756 = vmul.f32 %v720, %v751
          %v757 = vmul.f32 %v721, %v751
          %v758 = vmul.f32 %v722, %v751
          %v759 = vmul.f32 %v723, %v751
          %v760 = vmul.f32 %v724, %v751
          %v761 = vmul.f32 %v725, %v751
          %v762 = vmul.f32 %v726, %v751
          %v763 = vmul.f32 %v727, %v751
          %v764 = vmul.f32 %v728, %v751
          %v765 = vmul.f32 %v729, %v751
          %v766 = vmul.f32 %v730, %v751
          %v767 = vmul.f32 %v731, %v751
          %v768 = vmul.f32 %v732, %v751
          %v769 = vmul.f32 %v733, %v751
          %v770 = vmul.f32 %v734, %v751
          %v771 = vmul.f32 %v735, %v751
          %v772 = vmul.f32 %v736, %v751
          %v773 = vmul.f32 %v737, %v751
          %v774 = vmul.f32 %v738, %v751
          %v775 = vmul.f32 %v739, %v751
          %v776 = vmul.f32 %v740, %v751
          %v777 = vmul.f32 %v741, %v751
          %v778 = vmul.f32 %v742, %v751
          %v779 = vmul.f32 %v743, %v751
          %v780 = vmul.f32 %v744, %v751
          %v781 = vmul.f32 %v745, %v751
          %v782 = vmul.f32 %v746, %v751
          %v783 = vmul.f32 %v747, %v751
          %v784 = vmul.f32 %v748, %v751
          %v785 = vld [vmem:[%s299] sm:$0x1]
          %v787 = vperm.slane %v785, 0
          %v789 = vadd.f32 %v753, %v787
          %v790 = vadd.f32 %v754, %v787
          %v791 = vadd.f32 %v755, %v787
          %v792 = vadd.f32 %v756, %v787
          %v793 = vadd.f32 %v757, %v787
          %v794 = vadd.f32 %v758, %v787
          %v795 = vadd.f32 %v759, %v787
          %v796 = vadd.f32 %v760, %v787
          %v797 = vadd.f32 %v761, %v787
          %v798 = vadd.f32 %v762, %v787
          %v799 = vadd.f32 %v763, %v787
          %v800 = vadd.f32 %v764, %v787
          %v801 = vadd.f32 %v765, %v787
          %v802 = vadd.f32 %v766, %v787
          %v803 = vadd.f32 %v767, %v787
          %v804 = vadd.f32 %v768, %v787
          %v805 = vadd.f32 %v769, %v787
          %v806 = vadd.f32 %v770, %v787
          %v807 = vadd.f32 %v771, %v787
          %v808 = vadd.f32 %v772, %v787
          %v809 = vadd.f32 %v773, %v787
          %v810 = vadd.f32 %v774, %v787
          %v811 = vadd.f32 %v775, %v787
          %v812 = vadd.f32 %v776, %v787
          %v813 = vadd.f32 %v777, %v787
          %v814 = vadd.f32 %v778, %v787
          %v815 = vadd.f32 %v779, %v787
          %v816 = vadd.f32 %v780, %v787
          %v817 = vadd.f32 %v781, %v787
          %v818 = vadd.f32 %v782, %v787
          %v819 = vadd.f32 %v783, %v787
          %v820 = vadd.f32 %v784, %v787
          %v821 = vmax.f32 %v789, 0.0
          %v822 = vmax.f32 %v790, 0.0
          %v823 = vmax.f32 %v791, 0.0
          %v824 = vmax.f32 %v792, 0.0
          %v825 = vmax.f32 %v793, 0.0
          %v826 = vmax.f32 %v794, 0.0
          %v827 = vmax.f32 %v795, 0.0
          %v828 = vmax.f32 %v796, 0.0
          %v829 = vmax.f32 %v797, 0.0
          %v830 = vmax.f32 %v798, 0.0
          %v831 = vmax.f32 %v799, 0.0
          %v832 = vmax.f32 %v800, 0.0
          %v833 = vmax.f32 %v801, 0.0
          %v834 = vmax.f32 %v802, 0.0
          %v835 = vmax.f32 %v803, 0.0
          %v836 = vmax.f32 %v804, 0.0
          %v837 = vmax.f32 %v805, 0.0
          %v838 = vmax.f32 %v806, 0.0
          %v839 = vmax.f32 %v807, 0.0
          %v840 = vmax.f32 %v808, 0.0
          %v841 = vmax.f32 %v809, 0.0
          %v842 = vmax.f32 %v810, 0.0
          %v843 = vmax.f32 %v811, 0.0
          %v844 = vmax.f32 %v812, 0.0
          %v845 = vmax.f32 %v813, 0.0
          %v846 = vmax.f32 %v814, 0.0
          %v847 = vmax.f32 %v815, 0.0
          %v848 = vmax.f32 %v816, 0.0
          %v849 = vmax.f32 %v817, 0.0
          %v850 = vmax.f32 %v818, 0.0
          %v851 = vmax.f32 %v819, 0.0
          %v852 = vmax.f32 %v820, 0.0
          %853 = vst [vmem:[%s291] sm:$0xff] %v821
          %854 = vst [vmem:[%s291 + $0x8] sm:$0xff] %v822
          %855 = vst [vmem:[%s291 + $0x10] sm:$0xff] %v823
          %856 = vst [vmem:[%s291 + $0x18] sm:$0xff] %v824
          %857 = vst [vmem:[%s291 + $0x20] sm:$0xff] %v825
          %858 = vst [vmem:[%s291 + $0x28] sm:$0xff] %v826
          %859 = vst [vmem:[%s291 + $0x30] sm:$0xff] %v827
          %860 = vst [vmem:[%s291 + $0x38] sm:$0xff] %v828
          %861 = vst [vmem:[%s291 + $0x40] sm:$0xff] %v829
          %862 = vst [vmem:[%s291 + $0x48] sm:$0xff] %v830
          %863 = vst [vmem:[%s291 + $0x50] sm:$0xff] %v831
          %864 = vst [vmem:[%s291 + $0x58] sm:$0xff] %v832
          %865 = vst [vmem:[%s291 + $0x60] sm:$0xff] %v833
          %866 = vst [vmem:[%s291 + $0x68] sm:$0xff] %v834
          %867 = vst [vmem:[%s291 + $0x70] sm:$0xff] %v835
          %868 = vst [vmem:[%s291 + $0x78] sm:$0xff] %v836
          %869 = vst [vmem:[%s291 + $0x80] sm:$0xff] %v837
          %870 = vst [vmem:[%s291 + $0x88] sm:$0xff] %v838
          %871 = vst [vmem:[%s291 + $0x90] sm:$0xff] %v839
          %872 = vst [vmem:[%s291 + $0x98] sm:$0xff] %v840
          %873 = vst [vmem:[%s291 + $0xa0] sm:$0xff] %v841
          %874 = vst [vmem:[%s291 + $0xa8] sm:$0xff] %v842
          %875 = vst [vmem:[%s291 + $0xb0] sm:$0xff] %v843
          %876 = vst [vmem:[%s291 + $0xb8] sm:$0xff] %v844
          %877 = vst [vmem:[%s291 + $0xc0] sm:$0xff] %v845
          %878 = vst [vmem:[%s291 + $0xc8] sm:$0xff] %v846
          %879 = vst [vmem:[%s291 + $0xd0] sm:$0xff] %v847
          %880 = vst [vmem:[%s291 + $0xd8] sm:$0xff] %v848
          %881 = vst [vmem:[%s291 + $0xe0] sm:$0xff] %v849
          %882 = vst [vmem:[%s291 + $0xe8] sm:$0xff] %v850
          %883 = vst [vmem:[%s291 + $0xf0] sm:$0xff] %v851
          %884 = vst [vmem:[%s291 + $0xf8] sm:$0xff] %v852
        $region52: #{tpu_custom_call.1} parent=35 // pred_fallthru
          _
        %s885 = sand.u32 %s159, 1
        %s886 = scalar_lea.sflag [#allocation5], %s885
        %s887 = sand.u32 %s159, 1
        %s888 = smul.addr %s887, 256
        %s889 = scalar_lea.vmem [#allocation8], %s888
        // Predicated region
        $region53: #{tpu_custom_call.1} parent=35 // pred_check
          %p890 = pneg %p169
        $region54: #{tpu_custom_call.1} parent=35 // pred_check_branch
          %892 = sbr.rel (%p890) target = $region56
        $region55: #{tpu_custom_call.1} parent=35 // pred_region
          %s893 = smul.u32 32, %s27
          %895 = vsyncadd %s886, 0
          %s896 = sadd.s32 %s28, %s893
          %s897 = smul.addr %s896, 8
          %s898 = scalar_lea.hbm %s4, %s897
          %s899 = sshll.u32 %s889, 4
          %s900 = int_to_ptr.vmem [resolvable:$true] %s899
          %s901 = sshll.u32 %s898, 4
          %s902 = int_to_ptr.hbm [resolvable:$true] %s901
          %907 = dma.vmem_to_hbm [thread:$0]  %s900, 4096, %s902, %s886, 128, 128, 8
        $region56: #{tpu_custom_call.1} parent=35 // pred_fallthru
          _
      $region36: #{tpu_custom_call.1} parent=5 // pred_fallthru
        _
      %p908 = scmp.le.s32.totalorder 2, %s17
      // Predicated region
      $region57: #{tpu_custom_call.1} parent=5 // pred_check
        %p909 = pneg %p908
      $region58: #{tpu_custom_call.1} parent=5 // pred_check_branch
        %911 = sbr.rel (%p909) target = $region60
      $region59: #{tpu_custom_call.1} parent=5 // pred_region
        %s912 = ssub.s32 %s17, 2
        // Predicated region
        $region61: #{tpu_custom_call.1} parent=59 // pred_check
          %p913 = pneg %p175
        $region62: #{tpu_custom_call.1} parent=59 // pred_check_branch
          %915 = sbr.rel (%p913) target = $region64
        $region63: #{tpu_custom_call.1} parent=59 // pred_region
          %s916 = sand.u32 %s160, 1
          %s917 = scalar_lea.sflag [#allocation5], %s916
          %s918 = sand.u32 %s160, 1
          %s919 = smul.addr %s918, 256
          %s920 = scalar_lea.vmem [#allocation8], %s919
          %922 = dma.done %s917, 4096
        $region64: #{tpu_custom_call.1} parent=59 // pred_fallthru
          _
      $region60: #{tpu_custom_call.1} parent=5 // pred_fallthru
        _
    $region6: #{tpu_custom_call.1} parent=1 // loop_footer
      %s21 = sadd.s32 1, %s17
    $region7: #{tpu_custom_call.1} parent=1 // loop_footer_branch
      %16 = sbr.rel target = $region3
    $region8: #{tpu_custom_call.1} parent=1 // loop_exit
      _
    %923 = vsyncpa [#allocation4], 1
    %s924 = scalar_lea.sflag [#allocation4], 1
    %925 = vsyncpa %s924, 1
    %926 = vsyncpa [#allocation7], 1
    %927 = vsyncpa [#allocation5], 1
    %s928 = scalar_lea.sflag [#allocation5], 1
    %929 = vsyncpa %s928, 1

</llo_original>
